<compile_context>
chip_gen: v7x
topology: tpu7x:2x2x1
jax: 0.10.0
libtpu: 0.0.40
codegen_flags: <defaults>
</compile_context>

<pallas_src>
import functools

import jax
import jax.numpy as jnp
from jax.experimental import pallas as pl
from jax.experimental.pallas import tpu as pltpu


def _round_up(x, m):
    return (x + m - 1) // m * m


def _srl32(x, n):
    """Logical right shift for int32 values (arith shift + mask of sign-fill bits)."""
    return (x >> n) & ((1 << (32 - n)) - 1)


def mlp_block_kernel(seed_ref, x_ref, w_ref, b_ref, gamma_ref, beta_ref, o_ref, *,
                     out_features, dropout_p, training, eps, tile_rows, n_pad):
    # ---- Linear (MXU, bf16 inputs, f32 accumulation) + bias ----
    h = jnp.dot(x_ref[...], w_ref[...], preferred_element_type=jnp.float32)
    h = h + b_ref[...]

    # ---- ReLU ----
    h = jnp.maximum(h, 0.0)

    # ---- LayerNorm (one-pass stats over the true feature width) ----
    # Padded feature columns are exactly 0 here, so summing over the padded width
    # equals summing over the valid width; divide by the true out_features.
    inv_nf = 1.0 / float(out_features)
    s = jnp.sum(h, axis=-1, keepdims=True)
    s2 = jnp.sum(h * h, axis=-1, keepdims=True)
    mean = s * inv_nf
    var = jnp.maximum(s2 * inv_nf - mean * mean, 0.0)   # guard tiny cancellation
    h = (h - mean) * jax.lax.rsqrt(var + eps)
    h = h * gamma_ref[...] + beta_ref[...]

    # ---- Dropout (inverted scaling), compile-time elided in eval mode ----
    if training and dropout_p > 0.0:
        keep_p = 1.0 - float(dropout_p)
        inv_keep = 1.0 / keep_p
        # Counter-based hash RNG: deterministic in (seed, global row, col), independent
        # of the chosen tile size.  All-int32 math (wrap-around multiplies, logical
        # shifts emulated via shift+mask) for maximal Mosaic/interpret compatibility.
        # TODO(synk): RNG stream is not bitwise identical to torch.nn.Dropout.
        rows = (jax.lax.broadcasted_iota(jnp.int32, h.shape, 0)
                + pl.program_id(0) * tile_rows)
        cols = jax.lax.broadcasted_iota(jnp.int32, h.shape, 1)
        z = rows * n_pad + cols
        z = z + seed_ref[0] * (-1640531527)              # 0x9E3779B9 (wrapped)
        z = (z ^ _srl32(z, 16)) * 2142800173             # 0x7FEB352D
        z = (z ^ _srl32(z, 15)) * (-2073319797)          # 0x846CA68B (wrapped)
        bits = (z ^ _srl32(z, 16)) & 0x7FFFFFFF          # uniform in [0, 2^31)
        thresh = min(int(round(keep_p * 2147483648.0)), 2147483647)
        h = jnp.where(bits < jnp.int32(thresh), h * inv_keep, 0.0)

    o_ref[...] = h.astype(o_ref.dtype)


def _vmem_estimate(tr, k_pad, n_pad, in_itemsize, out_itemsize):
    x_tiles = 2 * tr * k_pad * in_itemsize       # double-buffered input tile
    o_tiles = 2 * tr * n_pad * out_itemsize      # double-buffered output tile
    w_res = 2 * k_pad * n_pad * in_itemsize      # resident weight (default double-buffer)
    params = 2 * 3 * n_pad * 4                   # bias / gamma / beta
    return x_tiles + o_tiles + w_res + params


def mlp_block(x, w, b, gamma, beta, seed, *, dropout_p=0.5, training=True,
              eps=1e-5, tile_rows=256, matmul_dtype=jnp.bfloat16,
              vmem_budget_bytes=32 * 1024 * 1024):
    """MLPBlock forward.  x: (..., in_features); w: (in_features, out_features)."""
    orig_shape = x.shape
    in_features = orig_shape[-1]
    out_features = w.shape[1]

    x2 = x.reshape(-1, in_features)
    n = x2.shape[0]

    # Lane-dense feature padding (multiples of 128).
    k_pad = _round_up(in_features, 128)
    n_pad = _round_up(out_features, 128)

    # Choose the row tile: as large as requested / needed, multiple of 16 (bf16 sublane
    # packing), clamped against the VMEM budget so it auto-shrinks on v7x (64 MiB).
    in_isz = jnp.dtype(matmul_dtype).itemsize
    out_isz = jnp.dtype(x.dtype).itemsize
    tr = min(_round_up(max(int(tile_rows), 16), 16), _round_up(max(n, 1), 16))
    while tr > 16 and _vmem_estimate(tr, k_pad, n_pad, in_isz, out_isz) > vmem_budget_bytes:
        tr = max(16, (tr // 2) // 16 * 16)
    tile_rows = tr

    rows_pad = _round_up(max(n, 1), tile_rows)

    # Zero-pad operands (padding is semantically inert; see header comment).
    xp = jnp.zeros((rows_pad, k_pad), x2.dtype).at[:n, :in_features].set(x2)
    xp = xp.astype(matmul_dtype)
    wp = jnp.zeros((k_pad, n_pad), w.dtype).at[:in_features, :out_features].set(w)
    wp = wp.astype(matmul_dtype)
    bp = jnp.zeros((1, n_pad), jnp.float32).at[:, :out_features].set(
        b.reshape(1, -1).astype(jnp.float32))
    gp = jnp.zeros((1, n_pad), jnp.float32).at[:, :out_features].set(
        gamma.reshape(1, -1).astype(jnp.float32))
    betap = jnp.zeros((1, n_pad), jnp.float32).at[:, :out_features].set(
        beta.reshape(1, -1).astype(jnp.float32))
    seed = jnp.asarray(seed, dtype=jnp.int32).reshape((1,))

    kernel = functools.partial(
        mlp_block_kernel, out_features=int(out_features), dropout_p=float(dropout_p),
        training=bool(training), eps=float(eps), tile_rows=int(tile_rows),
        n_pad=int(n_pad))

    out = pl.pallas_call(
        kernel,
        out_shape=jax.ShapeDtypeStruct((rows_pad, n_pad), x.dtype),
        grid_spec=pltpu.PrefetchScalarGridSpec(
            num_scalar_prefetch=1,                       # dropout seed -> SMEM
            grid=(rows_pad // tile_rows,),
            in_specs=[
                pl.BlockSpec((tile_rows, k_pad), lambda i, seed: (i, 0)),
                pl.BlockSpec((k_pad, n_pad), lambda i, seed: (0, 0)),
                pl.BlockSpec((1, n_pad), lambda i, seed: (0, 0)),
                pl.BlockSpec((1, n_pad), lambda i, seed: (0, 0)),
                pl.BlockSpec((1, n_pad), lambda i, seed: (0, 0)),
            ],
            out_specs=pl.BlockSpec((tile_rows, n_pad), lambda i, seed: (i, 0)),
        ),
        compiler_params=pltpu.CompilerParams(
            dimension_semantics=("parallel",),
            vmem_limit_bytes=64 * 1024 * 1024),
    )(seed, xp, wp, bp, gp, betap)

    out = out[:n, :out_features]
    return out.reshape(orig_shape[:-1] + (out_features,))


if __name__ == "__main__":
    key = jax.random.PRNGKey(0)
    k_x, k_w, k_b = jax.random.split(key, 3)

    batch, seq, in_features, out_features = 2, 8, 32, 32

    x = jax.random.normal(k_x, (batch, seq, in_features), dtype=jnp.float32)

    # Parameter init (shapes per nn.Linear / nn.LayerNorm defaults).
    bound = 1.0 / (in_features ** 0.5)
    w = jax.random.uniform(k_w, (in_features, out_features),
                           minval=-bound, maxval=bound, dtype=jnp.float32)
    b = jax.random.uniform(k_b, (out_features,),
                           minval=-bound, maxval=bound, dtype=jnp.float32)
    gamma = jnp.ones((out_features,), dtype=jnp.float32)    # LayerNorm.weight
    beta = jnp.zeros((out_features,), dtype=jnp.float32)    # LayerNorm.bias
    seed = jnp.array([0], dtype=jnp.int32)                  # dropout seed

    # Sanity check vs a pure-JAX reference (eval mode: dropout off, f32 matmul path).
    y_eval = mlp_block(x, w, b, gamma, beta, seed, dropout_p=0.5, training=False,
                       matmul_dtype=jnp.float32)
    h_ref = jnp.maximum(
        jnp.dot(x, w, precision=jax.lax.Precision.HIGHEST) + b, 0.0)
    mu = h_ref.mean(-1, keepdims=True)
    var = ((h_ref - mu) ** 2).mean(-1, keepdims=True)
    y_ref = (h_ref - mu) * jax.lax.rsqrt(var + 1e-5) * gamma + beta
    max_err = float(jnp.max(jnp.abs(y_eval - y_ref)))
    assert max_err < 5e-2, f"eval-mode mismatch vs reference: {max_err}"

    # Training mode (dropout active, bf16 MXU path) — the configuration of interest.
    y = mlp_block(x, w, b, gamma, beta, seed, dropout_p=0.5, training=True)
    jax.block_until_ready(y)

    assert y.shape == (batch, seq, out_features)
    assert bool(jnp.all(jnp.isfinite(y)))
    print("KERNEL_OK")
</pallas_src>

<mosaic_0001>
module attributes {stable_mosaic.version = 11 : i64} {
  func.func @mlp_block_kernel(%arg0: i32, %arg1: memref<1xi32, #tpu.memory_space<smem>>, %arg2: memref<16x128xf32, #tpu.memory_space<vmem>>, %arg3: memref<128x128xf32, #tpu.memory_space<vmem>>, %arg4: memref<1x128xf32, #tpu.memory_space<vmem>>, %arg5: memref<1x128xf32, #tpu.memory_space<vmem>>, %arg6: memref<1x128xf32, #tpu.memory_space<vmem>>, %arg7: memref<16x128xf32, #tpu.memory_space<vmem>>) attributes {dimension_semantics = [#tpu.dimension_semantics<parallel>], iteration_bounds = array<i64: 1>, scalar_prefetch = 1 : i64, scratch_operands = 0 : i64, tpu.core_type = #tpu.core_type<tc>, window_params = [{transform_indices = @transform_0, window_bounds = array<i64: 16, 128>}, {pipeline_mode = #tpu.pipeline_mode<synchronous>, transform_indices = @transform_1, window_bounds = array<i64: 128, 128>}, {pipeline_mode = #tpu.pipeline_mode<synchronous>, transform_indices = @transform_2, window_bounds = array<i64: 1, 128>}, {pipeline_mode = #tpu.pipeline_mode<synchronous>, transform_indices = @transform_3, window_bounds = array<i64: 1, 128>}, {pipeline_mode = #tpu.pipeline_mode<synchronous>, transform_indices = @transform_4, window_bounds = array<i64: 1, 128>}, {transform_indices = @transform_5, window_bounds = array<i64: 16, 128>}]} {
    %c0 = arith.constant 0 : index
    %c0_0 = arith.constant 0 : index
    %0 = vector.load %arg2[%c0, %c0_0] : memref<16x128xf32, #tpu.memory_space<vmem>>, vector<16x128xf32>
    %c0_1 = arith.constant 0 : index
    %c0_2 = arith.constant 0 : index
    %1 = vector.load %arg3[%c0_1, %c0_2] : memref<128x128xf32, #tpu.memory_space<vmem>>, vector<128x128xf32>
    %cst = arith.constant dense<0.000000e+00> : vector<16x128xf32>
    %2 = tpu.matmul %0, %1, %cst {dimension_numbers = #tpu.dot_dimension_numbers<[1], [0], [0], [1], [0, 0, 1, 1], [], []>} : vector<16x128xf32>, vector<128x128xf32>, vector<16x128xf32> -> vector<16x128xf32>
    %c0_3 = arith.constant 0 : index
    %c0_4 = arith.constant 0 : index
    %3 = vector.load %arg4[%c0_3, %c0_4] : memref<1x128xf32, #tpu.memory_space<vmem>>, vector<1x128xf32>
    %4 = vector.broadcast %3 : vector<1x128xf32> to vector<16x128xf32>
    %5 = arith.addf %2, %4 : vector<16x128xf32>
    %cst_5 = arith.constant 0.000000e+00 : f32
    %6 = vector.broadcast %cst_5 : f32 to vector<16x128xf32>
    %7 = arith.maximumf %5, %6 : vector<16x128xf32>
    %cst_6 = arith.constant dense<0.000000e+00> : vector<16xf32>
    %8 = vector.multi_reduction <add>, %7, %cst_6 [1] : vector<16x128xf32> to vector<16xf32>
    %9 = vector.shape_cast %8 : vector<16xf32> to vector<16x1xf32>
    %10 = arith.mulf %7, %7 : vector<16x128xf32>
    %cst_7 = arith.constant dense<0.000000e+00> : vector<16xf32>
    %11 = vector.multi_reduction <add>, %10, %cst_7 [1] : vector<16x128xf32> to vector<16xf32>
    %12 = vector.shape_cast %11 : vector<16xf32> to vector<16x1xf32>
    %cst_8 = arith.constant 3.125000e-02 : f32
    %13 = vector.broadcast %cst_8 : f32 to vector<16x1xf32>
    %14 = arith.mulf %9, %13 : vector<16x1xf32>
    %cst_9 = arith.constant 3.125000e-02 : f32
    %15 = vector.broadcast %cst_9 : f32 to vector<16x1xf32>
    %16 = arith.mulf %12, %15 : vector<16x1xf32>
    %17 = arith.mulf %14, %14 : vector<16x1xf32>
    %18 = arith.subf %16, %17 : vector<16x1xf32>
    %cst_10 = arith.constant 0.000000e+00 : f32
    %19 = vector.broadcast %cst_10 : f32 to vector<16x1xf32>
    %20 = arith.maximumf %18, %19 : vector<16x1xf32>
    %21 = vector.broadcast %14 : vector<16x1xf32> to vector<16x128xf32>
    %22 = arith.subf %7, %21 : vector<16x128xf32>
    %cst_11 = arith.constant 9.99999974E-6 : f32
    %23 = vector.broadcast %cst_11 : f32 to vector<16x1xf32>
    %24 = arith.addf %20, %23 : vector<16x1xf32>
    %25 = math.rsqrt %24 : vector<16x1xf32>
    %26 = vector.broadcast %25 : vector<16x1xf32> to vector<16x128xf32>
    %27 = arith.mulf %22, %26 : vector<16x128xf32>
    %c0_12 = arith.constant 0 : index
    %c0_13 = arith.constant 0 : index
    %28 = vector.load %arg5[%c0_12, %c0_13] : memref<1x128xf32, #tpu.memory_space<vmem>>, vector<1x128xf32>
    %29 = vector.broadcast %28 : vector<1x128xf32> to vector<16x128xf32>
    %30 = arith.mulf %27, %29 : vector<16x128xf32>
    %c0_14 = arith.constant 0 : index
    %c0_15 = arith.constant 0 : index
    %31 = vector.load %arg6[%c0_14, %c0_15] : memref<1x128xf32, #tpu.memory_space<vmem>>, vector<1x128xf32>
    %32 = vector.broadcast %31 : vector<1x128xf32> to vector<16x128xf32>
    %33 = arith.addf %30, %32 : vector<16x128xf32>
    %c0_16 = arith.constant 0 : index
    %c0_17 = arith.constant 0 : index
    %34 = vector.load %arg7[%c0_16, %c0_17] : memref<16x128xf32, #tpu.memory_space<vmem>>, vector<16x128xf32>
    tpu.vector_store %arg7[%c0_16, %c0_17], %33 {strides = array<i32>} : memref<16x128xf32, #tpu.memory_space<vmem>>, vector<16x128xf32>,
    return
  }
  func.func @transform_0(%arg0: i32, %arg1: memref<1xi32, #tpu.memory_space<smem>>) -> (i32, i32) {
    %c0_i32 = arith.constant 0 : i32
    %c0_i32_0 = arith.constant 0 : i32
    return %arg0, %c0_i32 : i32, i32
  }
  func.func @transform_1(%arg0: i32, %arg1: memref<1xi32, #tpu.memory_space<smem>>) -> (i32, i32) {
    %c0_i32 = arith.constant 0 : i32
    %c0_i32_0 = arith.constant 0 : i32
    %c0_i32_1 = arith.constant 0 : i32
    return %c0_i32, %c0_i32_0 : i32, i32
  }
  func.func @transform_2(%arg0: i32, %arg1: memref<1xi32, #tpu.memory_space<smem>>) -> (i32, i32) {
    %c0_i32 = arith.constant 0 : i32
    %c0_i32_0 = arith.constant 0 : i32
    %c0_i32_1 = arith.constant 0 : i32
    return %c0_i32, %c0_i32_0 : i32, i32
  }
  func.func @transform_3(%arg0: i32, %arg1: memref<1xi32, #tpu.memory_space<smem>>) -> (i32, i32) {
    %c0_i32 = arith.constant 0 : i32
    %c0_i32_0 = arith.constant 0 : i32
    %c0_i32_1 = arith.constant 0 : i32
    return %c0_i32, %c0_i32_0 : i32, i32
  }
  func.func @transform_4(%arg0: i32, %arg1: memref<1xi32, #tpu.memory_space<smem>>) -> (i32, i32) {
    %c0_i32 = arith.constant 0 : i32
    %c0_i32_0 = arith.constant 0 : i32
    %c0_i32_1 = arith.constant 0 : i32
    return %c0_i32, %c0_i32_0 : i32, i32
  }
  func.func @transform_5(%arg0: i32, %arg1: memref<1xi32, #tpu.memory_space<smem>>) -> (i32, i32) {
    %c0_i32 = arith.constant 0 : i32
    %c0_i32_0 = arith.constant 0 : i32
    return %arg0, %c0_i32 : i32, i32
  }
}

</mosaic_0001>

<llo_original>
// kernel: tpu_custom_call.1
$region0: #{tpu_custom_call.1}
  #allocation0 [shape = 'u32[]', space=smem, size = 0x4, offset = 0x4, fixed_abs, tag = 'smem constant byte address 0x4 - core index']
  #allocation1 [shape = 'u32[144,128]{1,0:T(1,128)}', space=vmem, size = 0x12000, scoped, tag = 'internal scratch']
  #allocation2 [shape = 's32[1]{0}', space=sflag, size = 0x4, scoped, tag = 'scoped memory for tpu_custom_call.1']
  #allocation3 [shape = 's32[1]{0:T(128)S(6)}', space=smem, size = 0x200, scoped, tag = 'prefetched SMEM operand 0']
  %s0 = inlined_call_operand.<no memory space> [shape: s32[1], index: 0, kind: input, shape index: {}]
  %s1 = inlined_call_operand.hbm [shape: f32[16,128], index: 1, kind: input, shape index: {}]
  %s2 = inlined_call_operand.hbm [shape: f32[128,128], index: 2, kind: input, shape index: {}]
  %s3 = inlined_call_operand.hbm [shape: f32[1,128], index: 3, kind: input, shape index: {}]
  %s4 = inlined_call_operand.hbm [shape: f32[1,128], index: 4, kind: input, shape index: {}]
  %s5 = inlined_call_operand.hbm [shape: f32[1,128], index: 5, kind: input, shape index: {}]
  %s6 = inlined_call_operand.hbm [shape: f32[16,128], index: 6, kind: output, shape index: {}]
  %s7 = sld [smem:[#allocation0]]
  $region50: #{tpu_custom_call.1} parent=0
    _
  %s9 = ssub.s32 1, %s7
  %s10 = scalar_select 0, %s9, %s7
  %11 = sst [smem:[#allocation3]] %s0
  $region1: #{tpu_custom_call.1} parent=0
    #allocation4 [shape = 'u8[8192]{0}', space=vmem, size = 0x2000, scoped, tag = 'input window, operand 1, single buffered']
    #allocation5 [shape = 's32[1]{0}', space=sflag, size = 0x4, scoped, tag = 'scoped memory for tpu_custom_call.1']
    #allocation6 [shape = 's32[1]{0}', space=sflag, size = 0x4, scoped, tag = 'scoped memory for tpu_custom_call.1']
    #allocation7 [shape = 'u8[65536]{0}', space=vmem, size = 0x10000, scoped, tag = 'input window, operand 2, single buffered']
    #allocation8 [shape = 's32[1]{0}', space=sflag, size = 0x4, scoped, tag = 'scoped memory for tpu_custom_call.1']
    #allocation9 [shape = 'u8[512]{0}', space=vmem, size = 0x400, scoped, tag = 'input window, operand 3, single buffered']
    #allocation10 [shape = 'u8[512]{0}', space=vmem, size = 0x400, scoped, tag = 'input window, operand 4, single buffered']
    #allocation11 [shape = 's32[1]{0}', space=sflag, size = 0x4, scoped, tag = 'scoped memory for tpu_custom_call.1']
    #allocation12 [shape = 'u8[512]{0}', space=vmem, size = 0x400, scoped, tag = 'input window, operand 5, single buffered']
    #allocation13 [shape = 'u8[8192]{0}', space=vmem, size = 0x2000, scoped, tag = 'output window, operand 0, single buffered']
    %12 = vsyncpa [#allocation5], 0
    %13 = vsyncpa [#allocation8], 0
    %14 = vsyncpa [#allocation11], 0
    %15 = vsyncpa [#allocation6], 0
    // Predicated region
    $region2: #{tpu_custom_call.1} parent=1 // pred_check
      _
    $region3: #{tpu_custom_call.1} parent=1 // pred_check_branch
      %17 = sbr.rel (0) target = $region5
    $region4: #{tpu_custom_call.1} parent=1 // pred_region
      %s19 = ssub.s32 256, 256
      %20 = vsyncadd [#allocation5], %s19
      %s21 = sshll.u32 [#allocation4], 4
      %s22 = int_to_ptr.vmem [resolvable:$true] %s21
      %27 = dma.hbm_to_vmem [thread:$0]  %s1, 256, %s22, [#allocation5], 128, 128, 8
    $region5: #{tpu_custom_call.1} parent=1 // pred_fallthru
      _
    // Predicated region
    $region6: #{tpu_custom_call.1} parent=1 // pred_check
      _
    $region7: #{tpu_custom_call.1} parent=1 // pred_check_branch
      %29 = sbr.rel (0) target = $region9
    $region8: #{tpu_custom_call.1} parent=1 // pred_region
      %s31 = ssub.s32 2048, 2048
      %32 = vsyncadd [#allocation8], %s31
      %s33 = sshll.u32 [#allocation7], 4
      %s34 = int_to_ptr.vmem [resolvable:$true] %s33
      %39 = dma.hbm_to_vmem [thread:$0]  %s2, 2048, %s34, [#allocation8], 128, 128, 8
    $region9: #{tpu_custom_call.1} parent=1 // pred_fallthru
      _
    // Predicated region
    $region10: #{tpu_custom_call.1} parent=1 // pred_check
      _
    $region11: #{tpu_custom_call.1} parent=1 // pred_check_branch
      %41 = sbr.rel (0) target = $region13
    $region12: #{tpu_custom_call.1} parent=1 // pred_region
      %s43 = ssub.s32 16, 16
      %44 = vsyncadd [#allocation8], %s43
      %s46 = sshll.u32 [#allocation9], 4
      %s47 = int_to_ptr.vmem [resolvable:$true] %s46
      %49 = dma.hbm_to_vmem [thread:$0]  %s3, 16, %s47, [#allocation8]
    $region13: #{tpu_custom_call.1} parent=1 // pred_fallthru
      _
    // Predicated region
    $region14: #{tpu_custom_call.1} parent=1 // pred_check
      _
    $region15: #{tpu_custom_call.1} parent=1 // pred_check_branch
      %51 = sbr.rel (0) target = $region17
    $region16: #{tpu_custom_call.1} parent=1 // pred_region
      %s53 = ssub.s32 16, 16
      %54 = vsyncadd [#allocation11], %s53
      %s56 = sshll.u32 [#allocation10], 4
      %s57 = int_to_ptr.vmem [resolvable:$true] %s56
      %59 = dma.hbm_to_vmem [thread:$0]  %s4, 16, %s57, [#allocation11]
    $region17: #{tpu_custom_call.1} parent=1 // pred_fallthru
      _
    // Predicated region
    $region18: #{tpu_custom_call.1} parent=1 // pred_check
      _
    $region19: #{tpu_custom_call.1} parent=1 // pred_check_branch
      %61 = sbr.rel (0) target = $region21
    $region20: #{tpu_custom_call.1} parent=1 // pred_region
      %s63 = ssub.s32 16, 16
      %64 = vsyncadd [#allocation11], %s63
      %s66 = sshll.u32 [#allocation12], 4
      %s67 = int_to_ptr.vmem [resolvable:$true] %s66
      %69 = dma.hbm_to_vmem [thread:$0]  %s5, 16, %s67, [#allocation11]
    $region21: #{tpu_custom_call.1} parent=1 // pred_fallthru
      _
    // Predicated region
    $region22: #{tpu_custom_call.1} parent=1 // pred_check
      _
    $region23: #{tpu_custom_call.1} parent=1 // pred_check_branch
      %71 = sbr.rel (0) target = $region25
    $region24: #{tpu_custom_call.1} parent=1 // pred_region
      %72 = dma.done [#allocation5], 256
    $region25: #{tpu_custom_call.1} parent=1 // pred_fallthru
      _
    // Predicated region
    $region26: #{tpu_custom_call.1} parent=1 // pred_check
      _
    $region27: #{tpu_custom_call.1} parent=1 // pred_check_branch
      %74 = sbr.rel (0) target = $region29
    $region28: #{tpu_custom_call.1} parent=1 // pred_region
      %75 = dma.done [#allocation8], 2048
    $region29: #{tpu_custom_call.1} parent=1 // pred_fallthru
      _
    // Predicated region
    $region30: #{tpu_custom_call.1} parent=1 // pred_check
      _
    $region31: #{tpu_custom_call.1} parent=1 // pred_check_branch
      %77 = sbr.rel (0) target = $region33
    $region32: #{tpu_custom_call.1} parent=1 // pred_region
      %78 = dma.done [#allocation8], 16
    $region33: #{tpu_custom_call.1} parent=1 // pred_fallthru
      _
    // Predicated region
    $region34: #{tpu_custom_call.1} parent=1 // pred_check
      _
    $region35: #{tpu_custom_call.1} parent=1 // pred_check_branch
      %80 = sbr.rel (0) target = $region37
    $region36: #{tpu_custom_call.1} parent=1 // pred_region
      %81 = dma.done [#allocation11], 16
    $region37: #{tpu_custom_call.1} parent=1 // pred_fallthru
      _
    // Predicated region
    $region38: #{tpu_custom_call.1} parent=1 // pred_check
      _
    $region39: #{tpu_custom_call.1} parent=1 // pred_check_branch
      %83 = sbr.rel (0) target = $region41
    $region40: #{tpu_custom_call.1} parent=1 // pred_region
      %84 = dma.done [#allocation11], 16
    $region41: #{tpu_custom_call.1} parent=1 // pred_fallthru
      _
    %v85 = vld [vmem:[#allocation4] sm:$0xff]
    %v86 = vld [vmem:[#allocation4 + $0x8] sm:$0xff]
    %v87 = vld [vmem:[#allocation7] sm:$0xff]
    %v88 = vld [vmem:[#allocation7 + $0x8] sm:$0xff]
    %v89 = vld [vmem:[#allocation7 + $0x10] sm:$0xff]
    %v90 = vld [vmem:[#allocation7 + $0x18] sm:$0xff]
    %v91 = vld [vmem:[#allocation7 + $0x20] sm:$0xff]
    %v92 = vld [vmem:[#allocation7 + $0x28] sm:$0xff]
    %v93 = vld [vmem:[#allocation7 + $0x30] sm:$0xff]
    %v94 = vld [vmem:[#allocation7 + $0x38] sm:$0xff]
    %v95 = vld [vmem:[#allocation7 + $0x40] sm:$0xff]
    %v96 = vld [vmem:[#allocation7 + $0x48] sm:$0xff]
    %v97 = vld [vmem:[#allocation7 + $0x50] sm:$0xff]
    %v98 = vld [vmem:[#allocation7 + $0x58] sm:$0xff]
    %v99 = vld [vmem:[#allocation7 + $0x60] sm:$0xff]
    %v100 = vld [vmem:[#allocation7 + $0x68] sm:$0xff]
    %v101 = vld [vmem:[#allocation7 + $0x70] sm:$0xff]
    %v102 = vld [vmem:[#allocation7 + $0x78] sm:$0xff]
    %v103 = vld [vmem:[#allocation9] sm:$0x1]
    %v105 = vlaneseq
    %v106 = vshrl.u32 %v105, 7
    %v107 = vsub.s32 0, %v106
    %v108 = vrot.slane %v103, %v107
    %110 = vmatprep.subr.mxu0 0.0
    %111 = vmatpush1.msra.mxu0 %v87
    %112 = vmatprep.subr.mxu0 0.0
    %113 = vmatpush1.msra.mxu0 %v88
    %114 = vmatprep.subr.mxu0 0.0
    %115 = vmatpush1.msra.mxu0 %v89
    %116 = vmatprep.subr.mxu0 0.0
    %117 = vmatpush1.msra.mxu0 %v90
    %118 = vmatprep.subr.mxu0 0.0
    %119 = vmatpush1.msra.mxu0 %v91
    %120 = vmatprep.subr.mxu0 0.0
    %121 = vmatpush1.msra.mxu0 %v92
    %122 = vmatprep.subr.mxu0 0.0
    %123 = vmatpush1.msra.mxu0 %v93
    %124 = vmatprep.subr.mxu0 0.0
    %125 = vmatpush1.msra.mxu0 %v94
    %126 = vmatprep.subr.mxu0 0.0
    %127 = vmatpush1.msra.mxu0 %v95
    %128 = vmatprep.subr.mxu0 0.0
    %129 = vmatpush1.msra.mxu0 %v96
    %130 = vmatprep.subr.mxu0 0.0
    %131 = vmatpush1.msra.mxu0 %v97
    %132 = vmatprep.subr.mxu0 0.0
    %133 = vmatpush1.msra.mxu0 %v98
    %134 = vmatprep.subr.mxu0 0.0
    %135 = vmatpush1.msra.mxu0 %v99
    %136 = vmatprep.subr.mxu0 0.0
    %137 = vmatpush1.msra.mxu0 %v100
    %138 = vmatprep.subr.mxu0 0.0
    %139 = vmatpush1.msra.mxu0 %v101
    %140 = vmatprep.subr.mxu0 0.0
    %141 = vmatpush1.msra.mxu0 %v102
    %142 = vmatprep.subr.mxu0 0.0
    %143 = vmatpush1.msra.mxu0 0.0
    %144 = vmatprep.subr.mxu0 0.0
    %145 = vmatpush1.msra.mxu0 0.0
    %146 = vmatprep.subr.mxu0 0.0
    %147 = vmatpush1.msra.mxu0 0.0
    %148 = vmatprep.subr.mxu0 0.0
    %149 = vmatpush1.msra.mxu0 0.0
    %150 = vmatprep.subr.mxu0 0.0
    %151 = vmatpush1.msra.mxu0 0.0
    %152 = vmatprep.subr.mxu0 0.0
    %153 = vmatpush1.msra.mxu0 0.0
    %154 = vmatprep.subr.mxu0 0.0
    %155 = vmatpush1.msra.mxu0 0.0
    %156 = vmatprep.subr.mxu0 0.0
    %157 = vmatpush1.msra.mxu0 0.0
    %158 = vmatprep.subr.mxu0 0.0
    %159 = vmatpush1.msra.mxu0 0.0
    %160 = vmatprep.subr.mxu0 0.0
    %161 = vmatpush1.msra.mxu0 0.0
    %162 = vmatprep.subr.mxu0 0.0
    %163 = vmatpush1.msra.mxu0 0.0
    %164 = vmatprep.subr.mxu0 0.0
    %165 = vmatpush1.msra.mxu0 0.0
    %166 = vmatprep.subr.mxu0 0.0
    %167 = vmatpush1.msra.mxu0 0.0
    %168 = vmatprep.subr.mxu0 0.0
    %169 = vmatpush1.msra.mxu0 0.0
    %170 = vmatprep.subr.mxu0 0.0
    %171 = vmatpush1.msra.mxu0 0.0
    %172 = vmatprep.subr.mxu0 0.0
    %173 = vmatpush1.msra.mxu0 0.0
    %174 = vmatprep.mubr.f32.mxu0 0.0
    %175 = vmatmul.mubr.f32.gmra.mrb[0].mxu0 %v85
    %v176 = vpop.f32.mrb[0].mxu0
    %v177 = vadd.f32 %v108, %v176
    %v178 = vpop.f32.mrb[0].mxu0
    %179 = vmatprep.mubr.f32.mxu0 0.0
    %180 = vmatmul.mubr.f32.gmra.mrb[0].mxu0 %v86
    %v181 = vpop.f32.mrb[0].mxu0
    %v182 = vadd.f32 %v108, %v181
    %v183 = vpop.f32.mrb[0].mxu0
    %184 = vdwg.mxu0
    %v185 = vmax.f32 %v177, 0.0
    %v186 = vmax.f32 %v182, 0.0
    %187 = vadd.xlane.f32.xlu0 %v185
    %v188 = vpop.xlane.xlu0 %187
    %189 = vadd.xlane.f32.xlu0 %v186
    %v190 = vpop.xlane.xlu0 %189
    %v191 = vmul.f32 %v185, %v185
    %v192 = vmul.f32 %v186, %v186
    %193 = vadd.xlane.f32.xlu0 %v191
    %v194 = vpop.xlane.xlu0 %193
    %195 = vadd.xlane.f32.xlu0 %v192
    %v196 = vpop.xlane.xlu0 %195
    %v197 = vmul.f32 %v188, 0.03125
    %v198 = vmul.f32 %v190, 0.03125
    %v199 = vmul.f32 %v194, 0.03125
    %v200 = vmul.f32 %v196, 0.03125
    %v201 = vmul.f32 %v197, %v197
    %v202 = vmul.f32 %v198, %v198
    %v203 = vsub.f32 %v199, %v201
    %v204 = vsub.f32 %v200, %v202
    %v205 = vmax.f32 %v203, 0.0
    %v206 = vmax.f32 %v204, 0.0
    %v207 = vsub.f32 %v185, %v197
    %v208 = vsub.f32 %v186, %v198
    %v209 = vadd.f32 %v205, 1e-05
    %v210 = vadd.f32 %v206, 1e-05
    %v211 = vrsqrt.pop %v209
    %v212 = vrsqrt.pop %v210
    %v213 = vmul.f32 %v207, %v211
    %v214 = vmul.f32 %v208, %v212
    %v215 = vld [vmem:[#allocation10] sm:$0x1]
    %v217 = vlaneseq
    %v218 = vshrl.u32 %v217, 7
    %v219 = vsub.s32 0, %v218
    %v220 = vrot.slane %v215, %v219
    %v222 = vmul.f32 %v213, %v220
    %v223 = vmul.f32 %v214, %v220
    %v224 = vld [vmem:[#allocation12] sm:$0x1]
    %v226 = vlaneseq
    %v227 = vshrl.u32 %v226, 7
    %v228 = vsub.s32 0, %v227
    %v229 = vrot.slane %v224, %v228
    %v231 = vadd.f32 %v222, %v229
    %v232 = vadd.f32 %v223, %v229
    %233 = vst [vmem:[#allocation13] sm:$0xff] %v231
    %234 = vst [vmem:[#allocation13 + $0x8] sm:$0xff] %v232
    // Predicated region
    $region42: #{tpu_custom_call.1} parent=1 // pred_check
      _
    $region43: #{tpu_custom_call.1} parent=1 // pred_check_branch
      %236 = sbr.rel (0) target = $region45
    $region44: #{tpu_custom_call.1} parent=1 // pred_region
      %s238 = ssub.s32 256, 256
      %239 = vsyncadd [#allocation6], %s238
      %s240 = sshll.u32 [#allocation13], 4
      %s241 = int_to_ptr.vmem [resolvable:$true] %s240
      %246 = dma.vmem_to_hbm [thread:$0]  %s241, 256, %s6, [#allocation6], 128, 128, 8
    $region45: #{tpu_custom_call.1} parent=1 // pred_fallthru
      _
    // Predicated region
    $region46: #{tpu_custom_call.1} parent=1 // pred_check
      _
    $region47: #{tpu_custom_call.1} parent=1 // pred_check_branch
      %248 = sbr.rel (0) target = $region49
    $region48: #{tpu_custom_call.1} parent=1 // pred_region
      %249 = dma.done [#allocation6], 256
    $region49: #{tpu_custom_call.1} parent=1 // pred_fallthru
      _
    %250 = vsyncpa [#allocation5], 1
    %251 = vsyncpa [#allocation8], 1
    %252 = vsyncpa [#allocation11], 1
    %253 = vsyncpa [#allocation6], 1

</llo_original>
